<compile_context>
chip_gen: v7x
topology: tpu7x:2x2x1
jax: 0.10.0
libtpu: 0.0.40
codegen_flags: <defaults>
</compile_context>

<pallas_src>
import functools

import jax
import jax.numpy as jnp
from jax.experimental import pallas as pl
from jax.experimental.pallas import tpu as pltpu

EPS = 1e-5


def bn_add_kernel(x_ref, res_ref, gamma_ref, beta_ref, o_ref, *, inv_l):
    # x_ref/res_ref: (C, L) fp32; gamma_ref/beta_ref: (C, 1) fp32
    # Phase 1: per-channel batch statistics, single pass (sum + sum of squares).
    x = x_ref[...]
    s = jnp.sum(x, axis=1, keepdims=True)
    sq = jnp.sum(x * x, axis=1, keepdims=True)
    mean = s * inv_l
    # Clamp: E[x^2] - mean^2 can go slightly negative from cancellation.
    var = jnp.maximum(sq * inv_l - mean * mean, 0.0)
    inv_std = jax.lax.rsqrt(var + EPS)          # EUP

    # Fold affine into per-channel scale/shift (computed on the (C,1) column).
    scale = gamma_ref[...] * inv_std
    shift = beta_ref[...] - mean * scale

    # Phase 2: re-read x from VMEM (don't keep the full block live across the
    # XLU reductions + scalar-column math; vld slots are cheap, spills aren't).
    o_ref[...] = x_ref[...] * scale + shift + res_ref[...]


def batchnorm_add(x455, x442, gamma, beta):
    """x455, x442: NCHW float32; gamma, beta: (C,) float32."""
    N, C, H, W = x455.shape
    L = N * H * W

    # NCHW -> (C, N*H*W); metadata-only for N == 1.
    x_cl = jnp.transpose(x455, (1, 0, 2, 3)).reshape(C, L)
    r_cl = jnp.transpose(x442, (1, 0, 2, 3)).reshape(C, L)
    g = gamma.reshape(C, 1)
    b = beta.reshape(C, 1)

    kernel = functools.partial(bn_add_kernel, inv_l=1.0 / L)

    # Single full-array block: footprint (~0.5 MB double-buffered) is far under
    # every generation's VMEM limit, and extra grid steps are pure overhead on
    # this latency-bound problem. Last block dim == full array dim (196), and
    # C == 200 is a multiple of 8, so the (8,128) rule is satisfied.
    out_cl = pl.pallas_call(
        kernel,
        out_shape=jax.ShapeDtypeStruct((C, L), jnp.float32),
        grid=(1,),
        in_specs=[
            pl.BlockSpec((C, L), lambda i: (0, 0)),
            pl.BlockSpec((C, L), lambda i: (0, 0)),
            pl.BlockSpec((C, 1), lambda i: (0, 0)),
            pl.BlockSpec((C, 1), lambda i: (0, 0)),
        ],
        out_specs=pl.BlockSpec((C, L), lambda i: (0, 0)),
        compiler_params=pltpu.CompilerParams(
            dimension_semantics=("arbitrary",)
        ),
    )(x_cl, r_cl, g, b)

    # (C, N*H*W) -> NCHW
    return jnp.transpose(out_cl.reshape(C, N, H, W), (1, 0, 2, 3))


def reference(x455, x442, gamma, beta):
    mean = jnp.mean(x455, axis=(0, 2, 3), keepdims=True)
    var = jnp.var(x455, axis=(0, 2, 3), keepdims=True)  # biased, like PyTorch BN
    y = (x455 - mean) / jnp.sqrt(var + EPS)
    y = y * gamma.reshape(1, -1, 1, 1) + beta.reshape(1, -1, 1, 1)
    return y + x442


if __name__ == "__main__":
    N, C, H, W = 1, 200, 14, 14
    key = jax.random.PRNGKey(0)
    k1, k2 = jax.random.split(key)
    x455 = jax.random.normal(k1, (N, C, H, W), dtype=jnp.float32)
    x442 = jax.random.normal(k2, (N, C, H, W), dtype=jnp.float32)

    # Deterministic (non-trivial) affine parameters for BatchNorm2d(200)
    gamma = 1.0 + 0.01 * jnp.arange(C, dtype=jnp.float32)
    beta = 0.005 * jnp.arange(C, dtype=jnp.float32)

    out = batchnorm_add(x455, x442, gamma, beta)
    out = jax.block_until_ready(out)

    ref = reference(x455, x442, gamma, beta)
    assert out.shape == (N, C, H, W)
    assert jnp.allclose(out, ref, atol=1e-4, rtol=1e-4), "mismatch vs reference"

    print("KERNEL_OK")
</pallas_src>

<mosaic_0001>
module attributes {stable_mosaic.version = 11 : i64} {
  func.func @bn_add_kernel(%arg0: i32, %arg1: memref<200x196xf32, #tpu.memory_space<vmem>>, %arg2: memref<200x196xf32, #tpu.memory_space<vmem>>, %arg3: memref<200x1xf32, #tpu.memory_space<vmem>>, %arg4: memref<200x1xf32, #tpu.memory_space<vmem>>, %arg5: memref<200x196xf32, #tpu.memory_space<vmem>>) attributes {dimension_semantics = [#tpu.dimension_semantics<arbitrary>], iteration_bounds = array<i64: 1>, scalar_prefetch = 0 : i64, scratch_operands = 0 : i64, tpu.core_type = #tpu.core_type<tc>, window_params = [{pipeline_mode = #tpu.pipeline_mode<synchronous>, transform_indices = @transform_0, window_bounds = array<i64: 200, 196>}, {pipeline_mode = #tpu.pipeline_mode<synchronous>, transform_indices = @transform_1, window_bounds = array<i64: 200, 196>}, {pipeline_mode = #tpu.pipeline_mode<synchronous>, transform_indices = @transform_2, window_bounds = array<i64: 200, 1>}, {pipeline_mode = #tpu.pipeline_mode<synchronous>, transform_indices = @transform_3, window_bounds = array<i64: 200, 1>}, {pipeline_mode = #tpu.pipeline_mode<synchronous>, transform_indices = @transform_4, window_bounds = array<i64: 200, 196>}]} {
    %c0 = arith.constant 0 : index
    %c0_0 = arith.constant 0 : index
    %0 = vector.load %arg1[%c0, %c0_0] : memref<200x196xf32, #tpu.memory_space<vmem>>, vector<200x196xf32>
    %cst = arith.constant dense<0.000000e+00> : vector<200xf32>
    %1 = vector.multi_reduction <add>, %0, %cst [1] : vector<200x196xf32> to vector<200xf32>
    %2 = vector.shape_cast %1 : vector<200xf32> to vector<200x1xf32>
    %3 = arith.mulf %0, %0 : vector<200x196xf32>
    %cst_1 = arith.constant dense<0.000000e+00> : vector<200xf32>
    %4 = vector.multi_reduction <add>, %3, %cst_1 [1] : vector<200x196xf32> to vector<200xf32>
    %5 = vector.shape_cast %4 : vector<200xf32> to vector<200x1xf32>
    %cst_2 = arith.constant 0.00510204071 : f32
    %6 = vector.broadcast %cst_2 : f32 to vector<200x1xf32>
    %7 = arith.mulf %2, %6 : vector<200x1xf32>
    %cst_3 = arith.constant 0.00510204071 : f32
    %8 = vector.broadcast %cst_3 : f32 to vector<200x1xf32>
    %9 = arith.mulf %5, %8 : vector<200x1xf32>
    %10 = arith.mulf %7, %7 : vector<200x1xf32>
    %11 = arith.subf %9, %10 : vector<200x1xf32>
    %cst_4 = arith.constant 0.000000e+00 : f32
    %12 = vector.broadcast %cst_4 : f32 to vector<200x1xf32>
    %13 = arith.maximumf %11, %12 : vector<200x1xf32>
    %cst_5 = arith.constant 9.99999974E-6 : f32
    %14 = vector.broadcast %cst_5 : f32 to vector<200x1xf32>
    %15 = arith.addf %13, %14 : vector<200x1xf32>
    %16 = math.rsqrt %15 : vector<200x1xf32>
    %c0_6 = arith.constant 0 : index
    %c0_7 = arith.constant 0 : index
    %17 = vector.load %arg3[%c0_6, %c0_7] : memref<200x1xf32, #tpu.memory_space<vmem>>, vector<200x1xf32>
    %18 = arith.mulf %17, %16 : vector<200x1xf32>
    %c0_8 = arith.constant 0 : index
    %c0_9 = arith.constant 0 : index
    %19 = vector.load %arg4[%c0_8, %c0_9] : memref<200x1xf32, #tpu.memory_space<vmem>>, vector<200x1xf32>
    %20 = arith.mulf %7, %18 : vector<200x1xf32>
    %21 = arith.subf %19, %20 : vector<200x1xf32>
    %c0_10 = arith.constant 0 : index
    %c0_11 = arith.constant 0 : index
    %22 = vector.load %arg1[%c0_10, %c0_11] : memref<200x196xf32, #tpu.memory_space<vmem>>, vector<200x196xf32>
    %23 = vector.broadcast %18 : vector<200x1xf32> to vector<200x196xf32>
    %24 = arith.mulf %22, %23 : vector<200x196xf32>
    %25 = vector.broadcast %21 : vector<200x1xf32> to vector<200x196xf32>
    %26 = arith.addf %24, %25 : vector<200x196xf32>
    %c0_12 = arith.constant 0 : index
    %c0_13 = arith.constant 0 : index
    %27 = vector.load %arg2[%c0_12, %c0_13] : memref<200x196xf32, #tpu.memory_space<vmem>>, vector<200x196xf32>
    %28 = arith.addf %26, %27 : vector<200x196xf32>
    %c0_14 = arith.constant 0 : index
    %c0_15 = arith.constant 0 : index
    %29 = vector.load %arg5[%c0_14, %c0_15] : memref<200x196xf32, #tpu.memory_space<vmem>>, vector<200x196xf32>
    tpu.vector_store %arg5[%c0_14, %c0_15], %28 {strides = array<i32>} : memref<200x196xf32, #tpu.memory_space<vmem>>, vector<200x196xf32>,
    return
  }
  func.func @transform_0(%arg0: i32) -> (i32, i32) {
    %c0_i32 = arith.constant 0 : i32
    %c0_i32_0 = arith.constant 0 : i32
    %c0_i32_1 = arith.constant 0 : i32
    return %c0_i32, %c0_i32_0 : i32, i32
  }
  func.func @transform_1(%arg0: i32) -> (i32, i32) {
    %c0_i32 = arith.constant 0 : i32
    %c0_i32_0 = arith.constant 0 : i32
    %c0_i32_1 = arith.constant 0 : i32
    return %c0_i32, %c0_i32_0 : i32, i32
  }
  func.func @transform_2(%arg0: i32) -> (i32, i32) {
    %c0_i32 = arith.constant 0 : i32
    %c0_i32_0 = arith.constant 0 : i32
    %c0_i32_1 = arith.constant 0 : i32
    return %c0_i32, %c0_i32_0 : i32, i32
  }
  func.func @transform_3(%arg0: i32) -> (i32, i32) {
    %c0_i32 = arith.constant 0 : i32
    %c0_i32_0 = arith.constant 0 : i32
    %c0_i32_1 = arith.constant 0 : i32
    return %c0_i32, %c0_i32_0 : i32, i32
  }
  func.func @transform_4(%arg0: i32) -> (i32, i32) {
    %c0_i32 = arith.constant 0 : i32
    %c0_i32_0 = arith.constant 0 : i32
    %c0_i32_1 = arith.constant 0 : i32
    return %c0_i32, %c0_i32_0 : i32, i32
  }
}

</mosaic_0001>

<llo_original>
// kernel: tpu_custom_call.1
$region0: #{tpu_custom_call.1}
  #allocation0 [shape = 'u32[]', space=smem, size = 0x4, offset = 0x4, fixed_abs, tag = 'smem constant byte address 0x4 - core index']
  #allocation1 [shape = 'u32[144,128]{1,0:T(1,128)}', space=vmem, size = 0x12000, scoped, tag = 'internal scratch']
  %s0 = inlined_call_operand.vmem [shape: f32[200,196], index: 0, kind: input, shape index: {}]
  %s1 = inlined_call_operand.hbm [shape: f32[200,196], index: 1, kind: input, shape index: {}]
  %s2 = inlined_call_operand.vmem [shape: f32[200,1], index: 2, kind: input, shape index: {}]
  %s3 = inlined_call_operand.vmem [shape: f32[200,1], index: 3, kind: input, shape index: {}]
  %s4 = inlined_call_operand.hbm [shape: f32[200,196], index: 4, kind: output, shape index: {}]
  %s5 = sld [smem:[#allocation0]]
  $region30: #{tpu_custom_call.1} parent=0
    _
  %s7 = ssub.s32 1, %s5
  %s8 = scalar_select 0, %s7, %s5
  $region1: #{tpu_custom_call.1} parent=0
    #allocation2 [shape = 'u8[204800]{0}', space=vmem, size = 0x32000, scoped, tag = 'input window, operand 1, single buffered']
    #allocation3 [shape = 's32[1]{0}', space=sflag, size = 0x4, scoped, tag = 'scoped memory for tpu_custom_call.1']
    #allocation4 [shape = 's32[1]{0}', space=sflag, size = 0x4, scoped, tag = 'scoped memory for tpu_custom_call.1']
    #allocation5 [shape = 'u8[204800]{0}', space=vmem, size = 0x32000, scoped, tag = 'output window, operand 0, single buffered']
    %9 = vsyncpa [#allocation3], 0
    %10 = vsyncpa [#allocation4], 0
    // Predicated region
    $region2: #{tpu_custom_call.1} parent=1 // pred_check
      _
    $region3: #{tpu_custom_call.1} parent=1 // pred_check_branch
      %12 = sbr.rel (0) target = $region5
    $region4: #{tpu_custom_call.1} parent=1 // pred_region
      _
    $region5: #{tpu_custom_call.1} parent=1 // pred_fallthru
      _
    // Predicated region
    $region6: #{tpu_custom_call.1} parent=1 // pred_check
      _
    $region7: #{tpu_custom_call.1} parent=1 // pred_check_branch
      %14 = sbr.rel (0) target = $region9
    $region8: #{tpu_custom_call.1} parent=1 // pred_region
      %s16 = ssub.s32 6400, 6400
      %17 = vsyncadd [#allocation3], %s16
      %s18 = sshll.u32 [#allocation2], 4
      %s19 = int_to_ptr.vmem [resolvable:$true] %s18
      %24 = dma.hbm_to_vmem [thread:$0]  %s1, 6400, %s19, [#allocation3], 256, 256, 16
    $region9: #{tpu_custom_call.1} parent=1 // pred_fallthru
      _
    // Predicated region
    $region10: #{tpu_custom_call.1} parent=1 // pred_check
      _
    $region11: #{tpu_custom_call.1} parent=1 // pred_check_branch
      %26 = sbr.rel (0) target = $region13
    $region12: #{tpu_custom_call.1} parent=1 // pred_region
      _
    $region13: #{tpu_custom_call.1} parent=1 // pred_fallthru
      _
    // Predicated region
    $region14: #{tpu_custom_call.1} parent=1 // pred_check
      _
    $region15: #{tpu_custom_call.1} parent=1 // pred_check_branch
      %28 = sbr.rel (0) target = $region17
    $region16: #{tpu_custom_call.1} parent=1 // pred_region
      _
    $region17: #{tpu_custom_call.1} parent=1 // pred_fallthru
      _
    // Predicated region
    $region18: #{tpu_custom_call.1} parent=1 // pred_check
      _
    $region19: #{tpu_custom_call.1} parent=1 // pred_check_branch
      %30 = sbr.rel (0) target = $region21
    $region20: #{tpu_custom_call.1} parent=1 // pred_region
      %31 = dma.done [#allocation3], 6400
    $region21: #{tpu_custom_call.1} parent=1 // pred_fallthru
      _
    %v32 = vld [vmem:[%s0] sm:$0xff]
    %v33 = vld [vmem:[%s0 + $0x8] sm:$0xff]
    %v34 = vld [vmem:[%s0 + $0x10] sm:$0xff]
    %v35 = vld [vmem:[%s0 + $0x18] sm:$0xff]
    %v36 = vld [vmem:[%s0 + $0x20] sm:$0xff]
    %v37 = vld [vmem:[%s0 + $0x28] sm:$0xff]
    %v38 = vld [vmem:[%s0 + $0x30] sm:$0xff]
    %v39 = vld [vmem:[%s0 + $0x38] sm:$0xff]
    %v40 = vld [vmem:[%s0 + $0x40] sm:$0xff]
    %v41 = vld [vmem:[%s0 + $0x48] sm:$0xff]
    %v42 = vld [vmem:[%s0 + $0x50] sm:$0xff]
    %v43 = vld [vmem:[%s0 + $0x58] sm:$0xff]
    %v44 = vld [vmem:[%s0 + $0x60] sm:$0xff]
    %v45 = vld [vmem:[%s0 + $0x68] sm:$0xff]
    %v46 = vld [vmem:[%s0 + $0x70] sm:$0xff]
    %v47 = vld [vmem:[%s0 + $0x78] sm:$0xff]
    %v48 = vld [vmem:[%s0 + $0x80] sm:$0xff]
    %v49 = vld [vmem:[%s0 + $0x88] sm:$0xff]
    %v50 = vld [vmem:[%s0 + $0x90] sm:$0xff]
    %v51 = vld [vmem:[%s0 + $0x98] sm:$0xff]
    %v52 = vld [vmem:[%s0 + $0xa0] sm:$0xff]
    %v53 = vld [vmem:[%s0 + $0xa8] sm:$0xff]
    %v54 = vld [vmem:[%s0 + $0xb0] sm:$0xff]
    %v55 = vld [vmem:[%s0 + $0xb8] sm:$0xff]
    %v56 = vld [vmem:[%s0 + $0xc0] sm:$0xff]
    %v57 = vld [vmem:[%s0 + $0xc8] sm:$0xff]
    %v58 = vld [vmem:[%s0 + $0xd0] sm:$0xff]
    %v59 = vld [vmem:[%s0 + $0xd8] sm:$0xff]
    %v60 = vld [vmem:[%s0 + $0xe0] sm:$0xff]
    %v61 = vld [vmem:[%s0 + $0xe8] sm:$0xff]
    %v62 = vld [vmem:[%s0 + $0xf0] sm:$0xff]
    %v63 = vld [vmem:[%s0 + $0xf8] sm:$0xff]
    %v64 = vld [vmem:[%s0 + $0x100] sm:$0xff]
    %v65 = vld [vmem:[%s0 + $0x108] sm:$0xff]
    %v66 = vld [vmem:[%s0 + $0x110] sm:$0xff]
    %v67 = vld [vmem:[%s0 + $0x118] sm:$0xff]
    %v68 = vld [vmem:[%s0 + $0x120] sm:$0xff]
    %v69 = vld [vmem:[%s0 + $0x128] sm:$0xff]
    %v70 = vld [vmem:[%s0 + $0x130] sm:$0xff]
    %v71 = vld [vmem:[%s0 + $0x138] sm:$0xff]
    %v72 = vld [vmem:[%s0 + $0x140] sm:$0xff]
    %v73 = vld [vmem:[%s0 + $0x148] sm:$0xff]
    %v74 = vld [vmem:[%s0 + $0x150] sm:$0xff]
    %v75 = vld [vmem:[%s0 + $0x158] sm:$0xff]
    %v76 = vld [vmem:[%s0 + $0x160] sm:$0xff]
    %v77 = vld [vmem:[%s0 + $0x168] sm:$0xff]
    %v78 = vld [vmem:[%s0 + $0x170] sm:$0xff]
    %v79 = vld [vmem:[%s0 + $0x178] sm:$0xff]
    %v80 = vld [vmem:[%s0 + $0x180] sm:$0xff]
    %v81 = vld [vmem:[%s0 + $0x188] sm:$0xff]
    %vm82 = vcmask 556032
    %v83 = vsel %vm82, %v33, 0.0
    %v84 = vadd.f32 %v32, %v83
    %85 = vadd.xlane.f32.xlu0 %v84
    %v86 = vpop.xlane.xlu0 %85
    %v87 = vsel %vm82, %v35, 0.0
    %v88 = vadd.f32 %v34, %v87
    %89 = vadd.xlane.f32.xlu0 %v88
    %v90 = vpop.xlane.xlu0 %89
    %v91 = vsel %vm82, %v37, 0.0
    %v92 = vadd.f32 %v36, %v91
    %93 = vadd.xlane.f32.xlu0 %v92
    %v94 = vpop.xlane.xlu0 %93
    %v95 = vsel %vm82, %v39, 0.0
    %v96 = vadd.f32 %v38, %v95
    %97 = vadd.xlane.f32.xlu0 %v96
    %v98 = vpop.xlane.xlu0 %97
    %v99 = vsel %vm82, %v41, 0.0
    %v100 = vadd.f32 %v40, %v99
    %101 = vadd.xlane.f32.xlu0 %v100
    %v102 = vpop.xlane.xlu0 %101
    %v103 = vsel %vm82, %v43, 0.0
    %v104 = vadd.f32 %v42, %v103
    %105 = vadd.xlane.f32.xlu0 %v104
    %v106 = vpop.xlane.xlu0 %105
    %v107 = vsel %vm82, %v45, 0.0
    %v108 = vadd.f32 %v44, %v107
    %109 = vadd.xlane.f32.xlu0 %v108
    %v110 = vpop.xlane.xlu0 %109
    %v111 = vsel %vm82, %v47, 0.0
    %v112 = vadd.f32 %v46, %v111
    %113 = vadd.xlane.f32.xlu0 %v112
    %v114 = vpop.xlane.xlu0 %113
    %v115 = vsel %vm82, %v49, 0.0
    %v116 = vadd.f32 %v48, %v115
    %117 = vadd.xlane.f32.xlu0 %v116
    %v118 = vpop.xlane.xlu0 %117
    %v119 = vsel %vm82, %v51, 0.0
    %v120 = vadd.f32 %v50, %v119
    %121 = vadd.xlane.f32.xlu0 %v120
    %v122 = vpop.xlane.xlu0 %121
    %v123 = vsel %vm82, %v53, 0.0
    %v124 = vadd.f32 %v52, %v123
    %125 = vadd.xlane.f32.xlu0 %v124
    %v126 = vpop.xlane.xlu0 %125
    %v127 = vsel %vm82, %v55, 0.0
    %v128 = vadd.f32 %v54, %v127
    %129 = vadd.xlane.f32.xlu0 %v128
    %v130 = vpop.xlane.xlu0 %129
    %v131 = vsel %vm82, %v57, 0.0
    %v132 = vadd.f32 %v56, %v131
    %133 = vadd.xlane.f32.xlu0 %v132
    %v134 = vpop.xlane.xlu0 %133
    %v135 = vsel %vm82, %v59, 0.0
    %v136 = vadd.f32 %v58, %v135
    %137 = vadd.xlane.f32.xlu0 %v136
    %v138 = vpop.xlane.xlu0 %137
    %v139 = vsel %vm82, %v61, 0.0
    %v140 = vadd.f32 %v60, %v139
    %141 = vadd.xlane.f32.xlu0 %v140
    %v142 = vpop.xlane.xlu0 %141
    %v143 = vsel %vm82, %v63, 0.0
    %v144 = vadd.f32 %v62, %v143
    %145 = vadd.xlane.f32.xlu0 %v144
    %v146 = vpop.xlane.xlu0 %145
    %v147 = vsel %vm82, %v65, 0.0
    %v148 = vadd.f32 %v64, %v147
    %149 = vadd.xlane.f32.xlu0 %v148
    %v150 = vpop.xlane.xlu0 %149
    %v151 = vsel %vm82, %v67, 0.0
    %v152 = vadd.f32 %v66, %v151
    %153 = vadd.xlane.f32.xlu0 %v152
    %v154 = vpop.xlane.xlu0 %153
    %v155 = vsel %vm82, %v69, 0.0
    %v156 = vadd.f32 %v68, %v155
    %157 = vadd.xlane.f32.xlu0 %v156
    %v158 = vpop.xlane.xlu0 %157
    %v159 = vsel %vm82, %v71, 0.0
    %v160 = vadd.f32 %v70, %v159
    %161 = vadd.xlane.f32.xlu0 %v160
    %v162 = vpop.xlane.xlu0 %161
    %v163 = vsel %vm82, %v73, 0.0
    %v164 = vadd.f32 %v72, %v163
    %165 = vadd.xlane.f32.xlu0 %v164
    %v166 = vpop.xlane.xlu0 %165
    %v167 = vsel %vm82, %v75, 0.0
    %v168 = vadd.f32 %v74, %v167
    %169 = vadd.xlane.f32.xlu0 %v168
    %v170 = vpop.xlane.xlu0 %169
    %v171 = vsel %vm82, %v77, 0.0
    %v172 = vadd.f32 %v76, %v171
    %173 = vadd.xlane.f32.xlu0 %v172
    %v174 = vpop.xlane.xlu0 %173
    %v175 = vsel %vm82, %v79, 0.0
    %v176 = vadd.f32 %v78, %v175
    %177 = vadd.xlane.f32.xlu0 %v176
    %v178 = vpop.xlane.xlu0 %177
    %v179 = vsel %vm82, %v81, 0.0
    %v180 = vadd.f32 %v80, %v179
    %181 = vadd.xlane.f32.xlu0 %v180
    %v182 = vpop.xlane.xlu0 %181
    %v183 = vmul.f32 %v32, %v32
    %v184 = vmul.f32 %v33, %v33
    %v185 = vmul.f32 %v34, %v34
    %v186 = vmul.f32 %v35, %v35
    %v187 = vmul.f32 %v36, %v36
    %v188 = vmul.f32 %v37, %v37
    %v189 = vmul.f32 %v38, %v38
    %v190 = vmul.f32 %v39, %v39
    %v191 = vmul.f32 %v40, %v40
    %v192 = vmul.f32 %v41, %v41
    %v193 = vmul.f32 %v42, %v42
    %v194 = vmul.f32 %v43, %v43
    %v195 = vmul.f32 %v44, %v44
    %v196 = vmul.f32 %v45, %v45
    %v197 = vmul.f32 %v46, %v46
    %v198 = vmul.f32 %v47, %v47
    %v199 = vmul.f32 %v48, %v48
    %v200 = vmul.f32 %v49, %v49
    %v201 = vmul.f32 %v50, %v50
    %v202 = vmul.f32 %v51, %v51
    %v203 = vmul.f32 %v52, %v52
    %v204 = vmul.f32 %v53, %v53
    %v205 = vmul.f32 %v54, %v54
    %v206 = vmul.f32 %v55, %v55
    %v207 = vmul.f32 %v56, %v56
    %v208 = vmul.f32 %v57, %v57
    %v209 = vmul.f32 %v58, %v58
    %v210 = vmul.f32 %v59, %v59
    %v211 = vmul.f32 %v60, %v60
    %v212 = vmul.f32 %v61, %v61
    %v213 = vmul.f32 %v62, %v62
    %v214 = vmul.f32 %v63, %v63
    %v215 = vmul.f32 %v64, %v64
    %v216 = vmul.f32 %v65, %v65
    %v217 = vmul.f32 %v66, %v66
    %v218 = vmul.f32 %v67, %v67
    %v219 = vmul.f32 %v68, %v68
    %v220 = vmul.f32 %v69, %v69
    %v221 = vmul.f32 %v70, %v70
    %v222 = vmul.f32 %v71, %v71
    %v223 = vmul.f32 %v72, %v72
    %v224 = vmul.f32 %v73, %v73
    %v225 = vmul.f32 %v74, %v74
    %v226 = vmul.f32 %v75, %v75
    %v227 = vmul.f32 %v76, %v76
    %v228 = vmul.f32 %v77, %v77
    %v229 = vmul.f32 %v78, %v78
    %v230 = vmul.f32 %v79, %v79
    %v231 = vmul.f32 %v80, %v80
    %v232 = vmul.f32 %v81, %v81
    %v233 = vsel %vm82, %v184, 0.0
    %v234 = vadd.f32 %v183, %v233
    %235 = vadd.xlane.f32.xlu0 %v234
    %v236 = vpop.xlane.xlu0 %235
    %v237 = vsel %vm82, %v186, 0.0
    %v238 = vadd.f32 %v185, %v237
    %239 = vadd.xlane.f32.xlu0 %v238
    %v240 = vpop.xlane.xlu0 %239
    %v241 = vsel %vm82, %v188, 0.0
    %v242 = vadd.f32 %v187, %v241
    %243 = vadd.xlane.f32.xlu0 %v242
    %v244 = vpop.xlane.xlu0 %243
    %v245 = vsel %vm82, %v190, 0.0
    %v246 = vadd.f32 %v189, %v245
    %247 = vadd.xlane.f32.xlu0 %v246
    %v248 = vpop.xlane.xlu0 %247
    %v249 = vsel %vm82, %v192, 0.0
    %v250 = vadd.f32 %v191, %v249
    %251 = vadd.xlane.f32.xlu0 %v250
    %v252 = vpop.xlane.xlu0 %251
    %v253 = vsel %vm82, %v194, 0.0
    %v254 = vadd.f32 %v193, %v253
    %255 = vadd.xlane.f32.xlu0 %v254
    %v256 = vpop.xlane.xlu0 %255
    %v257 = vsel %vm82, %v196, 0.0
    %v258 = vadd.f32 %v195, %v257
    %259 = vadd.xlane.f32.xlu0 %v258
    %v260 = vpop.xlane.xlu0 %259
    %v261 = vsel %vm82, %v198, 0.0
    %v262 = vadd.f32 %v197, %v261
    %263 = vadd.xlane.f32.xlu0 %v262
    %v264 = vpop.xlane.xlu0 %263
    %v265 = vsel %vm82, %v200, 0.0
    %v266 = vadd.f32 %v199, %v265
    %267 = vadd.xlane.f32.xlu0 %v266
    %v268 = vpop.xlane.xlu0 %267
    %v269 = vsel %vm82, %v202, 0.0
    %v270 = vadd.f32 %v201, %v269
    %271 = vadd.xlane.f32.xlu0 %v270
    %v272 = vpop.xlane.xlu0 %271
    %v273 = vsel %vm82, %v204, 0.0
    %v274 = vadd.f32 %v203, %v273
    %275 = vadd.xlane.f32.xlu0 %v274
    %v276 = vpop.xlane.xlu0 %275
    %v277 = vsel %vm82, %v206, 0.0
    %v278 = vadd.f32 %v205, %v277
    %279 = vadd.xlane.f32.xlu0 %v278
    %v280 = vpop.xlane.xlu0 %279
    %v281 = vsel %vm82, %v208, 0.0
    %v282 = vadd.f32 %v207, %v281
    %283 = vadd.xlane.f32.xlu0 %v282
    %v284 = vpop.xlane.xlu0 %283
    %v285 = vsel %vm82, %v210, 0.0
    %v286 = vadd.f32 %v209, %v285
    %287 = vadd.xlane.f32.xlu0 %v286
    %v288 = vpop.xlane.xlu0 %287
    %v289 = vsel %vm82, %v212, 0.0
    %v290 = vadd.f32 %v211, %v289
    %291 = vadd.xlane.f32.xlu0 %v290
    %v292 = vpop.xlane.xlu0 %291
    %v293 = vsel %vm82, %v214, 0.0
    %v294 = vadd.f32 %v213, %v293
    %295 = vadd.xlane.f32.xlu0 %v294
    %v296 = vpop.xlane.xlu0 %295
    %v297 = vsel %vm82, %v216, 0.0
    %v298 = vadd.f32 %v215, %v297
    %299 = vadd.xlane.f32.xlu0 %v298
    %v300 = vpop.xlane.xlu0 %299
    %v301 = vsel %vm82, %v218, 0.0
    %v302 = vadd.f32 %v217, %v301
    %303 = vadd.xlane.f32.xlu0 %v302
    %v304 = vpop.xlane.xlu0 %303
    %v305 = vsel %vm82, %v220, 0.0
    %v306 = vadd.f32 %v219, %v305
    %307 = vadd.xlane.f32.xlu0 %v306
    %v308 = vpop.xlane.xlu0 %307
    %v309 = vsel %vm82, %v222, 0.0
    %v310 = vadd.f32 %v221, %v309
    %311 = vadd.xlane.f32.xlu0 %v310
    %v312 = vpop.xlane.xlu0 %311
    %v313 = vsel %vm82, %v224, 0.0
    %v314 = vadd.f32 %v223, %v313
    %315 = vadd.xlane.f32.xlu0 %v314
    %v316 = vpop.xlane.xlu0 %315
    %v317 = vsel %vm82, %v226, 0.0
    %v318 = vadd.f32 %v225, %v317
    %319 = vadd.xlane.f32.xlu0 %v318
    %v320 = vpop.xlane.xlu0 %319
    %v321 = vsel %vm82, %v228, 0.0
    %v322 = vadd.f32 %v227, %v321
    %323 = vadd.xlane.f32.xlu0 %v322
    %v324 = vpop.xlane.xlu0 %323
    %v325 = vsel %vm82, %v230, 0.0
    %v326 = vadd.f32 %v229, %v325
    %327 = vadd.xlane.f32.xlu0 %v326
    %v328 = vpop.xlane.xlu0 %327
    %v329 = vsel %vm82, %v232, 0.0
    %v330 = vadd.f32 %v231, %v329
    %331 = vadd.xlane.f32.xlu0 %v330
    %v332 = vpop.xlane.xlu0 %331
    %v333 = vmul.f32 %v86, 0.0051020407
    %v334 = vmul.f32 %v90, 0.0051020407
    %v335 = vmul.f32 %v94, 0.0051020407
    %v336 = vmul.f32 %v98, 0.0051020407
    %v337 = vmul.f32 %v102, 0.0051020407
    %v338 = vmul.f32 %v106, 0.0051020407
    %v339 = vmul.f32 %v110, 0.0051020407
    %v340 = vmul.f32 %v114, 0.0051020407
    %v341 = vmul.f32 %v118, 0.0051020407
    %v342 = vmul.f32 %v122, 0.0051020407
    %v343 = vmul.f32 %v126, 0.0051020407
    %v344 = vmul.f32 %v130, 0.0051020407
    %v345 = vmul.f32 %v134, 0.0051020407
    %v346 = vmul.f32 %v138, 0.0051020407
    %v347 = vmul.f32 %v142, 0.0051020407
    %v348 = vmul.f32 %v146, 0.0051020407
    %v349 = vmul.f32 %v150, 0.0051020407
    %v350 = vmul.f32 %v154, 0.0051020407
    %v351 = vmul.f32 %v158, 0.0051020407
    %v352 = vmul.f32 %v162, 0.0051020407
    %v353 = vmul.f32 %v166, 0.0051020407
    %v354 = vmul.f32 %v170, 0.0051020407
    %v355 = vmul.f32 %v174, 0.0051020407
    %v356 = vmul.f32 %v178, 0.0051020407
    %v357 = vmul.f32 %v182, 0.0051020407
    %v358 = vmul.f32 %v236, 0.0051020407
    %v359 = vmul.f32 %v240, 0.0051020407
    %v360 = vmul.f32 %v244, 0.0051020407
    %v361 = vmul.f32 %v248, 0.0051020407
    %v362 = vmul.f32 %v252, 0.0051020407
    %v363 = vmul.f32 %v256, 0.0051020407
    %v364 = vmul.f32 %v260, 0.0051020407
    %v365 = vmul.f32 %v264, 0.0051020407
    %v366 = vmul.f32 %v268, 0.0051020407
    %v367 = vmul.f32 %v272, 0.0051020407
    %v368 = vmul.f32 %v276, 0.0051020407
    %v369 = vmul.f32 %v280, 0.0051020407
    %v370 = vmul.f32 %v284, 0.0051020407
    %v371 = vmul.f32 %v288, 0.0051020407
    %v372 = vmul.f32 %v292, 0.0051020407
    %v373 = vmul.f32 %v296, 0.0051020407
    %v374 = vmul.f32 %v300, 0.0051020407
    %v375 = vmul.f32 %v304, 0.0051020407
    %v376 = vmul.f32 %v308, 0.0051020407
    %v377 = vmul.f32 %v312, 0.0051020407
    %v378 = vmul.f32 %v316, 0.0051020407
    %v379 = vmul.f32 %v320, 0.0051020407
    %v380 = vmul.f32 %v324, 0.0051020407
    %v381 = vmul.f32 %v328, 0.0051020407
    %v382 = vmul.f32 %v332, 0.0051020407
    %v383 = vmul.f32 %v333, %v333
    %v384 = vmul.f32 %v334, %v334
    %v385 = vmul.f32 %v335, %v335
    %v386 = vmul.f32 %v336, %v336
    %v387 = vmul.f32 %v337, %v337
    %v388 = vmul.f32 %v338, %v338
    %v389 = vmul.f32 %v339, %v339
    %v390 = vmul.f32 %v340, %v340
    %v391 = vmul.f32 %v341, %v341
    %v392 = vmul.f32 %v342, %v342
    %v393 = vmul.f32 %v343, %v343
    %v394 = vmul.f32 %v344, %v344
    %v395 = vmul.f32 %v345, %v345
    %v396 = vmul.f32 %v346, %v346
    %v397 = vmul.f32 %v347, %v347
    %v398 = vmul.f32 %v348, %v348
    %v399 = vmul.f32 %v349, %v349
    %v400 = vmul.f32 %v350, %v350
    %v401 = vmul.f32 %v351, %v351
    %v402 = vmul.f32 %v352, %v352
    %v403 = vmul.f32 %v353, %v353
    %v404 = vmul.f32 %v354, %v354
    %v405 = vmul.f32 %v355, %v355
    %v406 = vmul.f32 %v356, %v356
    %v407 = vmul.f32 %v357, %v357
    %v408 = vsub.f32 %v358, %v383
    %v409 = vsub.f32 %v359, %v384
    %v410 = vsub.f32 %v360, %v385
    %v411 = vsub.f32 %v361, %v386
    %v412 = vsub.f32 %v362, %v387
    %v413 = vsub.f32 %v363, %v388
    %v414 = vsub.f32 %v364, %v389
    %v415 = vsub.f32 %v365, %v390
    %v416 = vsub.f32 %v366, %v391
    %v417 = vsub.f32 %v367, %v392
    %v418 = vsub.f32 %v368, %v393
    %v419 = vsub.f32 %v369, %v394
    %v420 = vsub.f32 %v370, %v395
    %v421 = vsub.f32 %v371, %v396
    %v422 = vsub.f32 %v372, %v397
    %v423 = vsub.f32 %v373, %v398
    %v424 = vsub.f32 %v374, %v399
    %v425 = vsub.f32 %v375, %v400
    %v426 = vsub.f32 %v376, %v401
    %v427 = vsub.f32 %v377, %v402
    %v428 = vsub.f32 %v378, %v403
    %v429 = vsub.f32 %v379, %v404
    %v430 = vsub.f32 %v380, %v405
    %v431 = vsub.f32 %v381, %v406
    %v432 = vsub.f32 %v382, %v407
    %v433 = vmax.f32 %v408, 0.0
    %v434 = vmax.f32 %v409, 0.0
    %v435 = vmax.f32 %v410, 0.0
    %v436 = vmax.f32 %v411, 0.0
    %v437 = vmax.f32 %v412, 0.0
    %v438 = vmax.f32 %v413, 0.0
    %v439 = vmax.f32 %v414, 0.0
    %v440 = vmax.f32 %v415, 0.0
    %v441 = vmax.f32 %v416, 0.0
    %v442 = vmax.f32 %v417, 0.0
    %v443 = vmax.f32 %v418, 0.0
    %v444 = vmax.f32 %v419, 0.0
    %v445 = vmax.f32 %v420, 0.0
    %v446 = vmax.f32 %v421, 0.0
    %v447 = vmax.f32 %v422, 0.0
    %v448 = vmax.f32 %v423, 0.0
    %v449 = vmax.f32 %v424, 0.0
    %v450 = vmax.f32 %v425, 0.0
    %v451 = vmax.f32 %v426, 0.0
    %v452 = vmax.f32 %v427, 0.0
    %v453 = vmax.f32 %v428, 0.0
    %v454 = vmax.f32 %v429, 0.0
    %v455 = vmax.f32 %v430, 0.0
    %v456 = vmax.f32 %v431, 0.0
    %v457 = vmax.f32 %v432, 0.0
    %v458 = vadd.f32 %v433, 1e-05
    %v459 = vadd.f32 %v434, 1e-05
    %v460 = vadd.f32 %v435, 1e-05
    %v461 = vadd.f32 %v436, 1e-05
    %v462 = vadd.f32 %v437, 1e-05
    %v463 = vadd.f32 %v438, 1e-05
    %v464 = vadd.f32 %v439, 1e-05
    %v465 = vadd.f32 %v440, 1e-05
    %v466 = vadd.f32 %v441, 1e-05
    %v467 = vadd.f32 %v442, 1e-05
    %v468 = vadd.f32 %v443, 1e-05
    %v469 = vadd.f32 %v444, 1e-05
    %v470 = vadd.f32 %v445, 1e-05
    %v471 = vadd.f32 %v446, 1e-05
    %v472 = vadd.f32 %v447, 1e-05
    %v473 = vadd.f32 %v448, 1e-05
    %v474 = vadd.f32 %v449, 1e-05
    %v475 = vadd.f32 %v450, 1e-05
    %v476 = vadd.f32 %v451, 1e-05
    %v477 = vadd.f32 %v452, 1e-05
    %v478 = vadd.f32 %v453, 1e-05
    %v479 = vadd.f32 %v454, 1e-05
    %v480 = vadd.f32 %v455, 1e-05
    %v481 = vadd.f32 %v456, 1e-05
    %v482 = vadd.f32 %v457, 1e-05
    %v483 = vrsqrt.pop %v458
    %v484 = vrsqrt.pop %v459
    %v485 = vrsqrt.pop %v460
    %v486 = vrsqrt.pop %v461
    %v487 = vrsqrt.pop %v462
    %v488 = vrsqrt.pop %v463
    %v489 = vrsqrt.pop %v464
    %v490 = vrsqrt.pop %v465
    %v491 = vrsqrt.pop %v466
    %v492 = vrsqrt.pop %v467
    %v493 = vrsqrt.pop %v468
    %v494 = vrsqrt.pop %v469
    %v495 = vrsqrt.pop %v470
    %v496 = vrsqrt.pop %v471
    %v497 = vrsqrt.pop %v472
    %v498 = vrsqrt.pop %v473
    %v499 = vrsqrt.pop %v474
    %v500 = vrsqrt.pop %v475
    %v501 = vrsqrt.pop %v476
    %v502 = vrsqrt.pop %v477
    %v503 = vrsqrt.pop %v478
    %v504 = vrsqrt.pop %v479
    %v505 = vrsqrt.pop %v480
    %v506 = vrsqrt.pop %v481
    %v507 = vrsqrt.pop %v482
    %v508 = vld [vmem:[%s2] sm:$0xff]
    %v509 = vld [vmem:[%s2 + $0x8] sm:$0xff]
    %v510 = vld [vmem:[%s2 + $0x10] sm:$0xff]
    %v511 = vld [vmem:[%s2 + $0x18] sm:$0xff]
    %v512 = vld [vmem:[%s2 + $0x20] sm:$0xff]
    %v513 = vld [vmem:[%s2 + $0x28] sm:$0xff]
    %v514 = vld [vmem:[%s2 + $0x30] sm:$0xff]
    %v515 = vld [vmem:[%s2 + $0x38] sm:$0xff]
    %v516 = vld [vmem:[%s2 + $0x40] sm:$0xff]
    %v517 = vld [vmem:[%s2 + $0x48] sm:$0xff]
    %v518 = vld [vmem:[%s2 + $0x50] sm:$0xff]
    %v519 = vld [vmem:[%s2 + $0x58] sm:$0xff]
    %v520 = vld [vmem:[%s2 + $0x60] sm:$0xff]
    %v521 = vld [vmem:[%s2 + $0x68] sm:$0xff]
    %v522 = vld [vmem:[%s2 + $0x70] sm:$0xff]
    %v523 = vld [vmem:[%s2 + $0x78] sm:$0xff]
    %v524 = vld [vmem:[%s2 + $0x80] sm:$0xff]
    %v525 = vld [vmem:[%s2 + $0x88] sm:$0xff]
    %v526 = vld [vmem:[%s2 + $0x90] sm:$0xff]
    %v527 = vld [vmem:[%s2 + $0x98] sm:$0xff]
    %v528 = vld [vmem:[%s2 + $0xa0] sm:$0xff]
    %v529 = vld [vmem:[%s2 + $0xa8] sm:$0xff]
    %v530 = vld [vmem:[%s2 + $0xb0] sm:$0xff]
    %v531 = vld [vmem:[%s2 + $0xb8] sm:$0xff]
    %v532 = vld [vmem:[%s2 + $0xc0] sm:$0xff]
    %v533 = vmul.f32 %v508, %v483
    %v534 = vmul.f32 %v509, %v484
    %v535 = vmul.f32 %v510, %v485
    %v536 = vmul.f32 %v511, %v486
    %v537 = vmul.f32 %v512, %v487
    %v538 = vmul.f32 %v513, %v488
    %v539 = vmul.f32 %v514, %v489
    %v540 = vmul.f32 %v515, %v490
    %v541 = vmul.f32 %v516, %v491
    %v542 = vmul.f32 %v517, %v492
    %v543 = vmul.f32 %v518, %v493
    %v544 = vmul.f32 %v519, %v494
    %v545 = vmul.f32 %v520, %v495
    %v546 = vmul.f32 %v521, %v496
    %v547 = vmul.f32 %v522, %v497
    %v548 = vmul.f32 %v523, %v498
    %v549 = vmul.f32 %v524, %v499
    %v550 = vmul.f32 %v525, %v500
    %v551 = vmul.f32 %v526, %v501
    %v552 = vmul.f32 %v527, %v502
    %v553 = vmul.f32 %v528, %v503
    %v554 = vmul.f32 %v529, %v504
    %v555 = vmul.f32 %v530, %v505
    %v556 = vmul.f32 %v531, %v506
    %v557 = vmul.f32 %v532, %v507
    %v558 = vld [vmem:[%s3] sm:$0xff]
    %v559 = vld [vmem:[%s3 + $0x8] sm:$0xff]
    %v560 = vld [vmem:[%s3 + $0x10] sm:$0xff]
    %v561 = vld [vmem:[%s3 + $0x18] sm:$0xff]
    %v562 = vld [vmem:[%s3 + $0x20] sm:$0xff]
    %v563 = vld [vmem:[%s3 + $0x28] sm:$0xff]
    %v564 = vld [vmem:[%s3 + $0x30] sm:$0xff]
    %v565 = vld [vmem:[%s3 + $0x38] sm:$0xff]
    %v566 = vld [vmem:[%s3 + $0x40] sm:$0xff]
    %v567 = vld [vmem:[%s3 + $0x48] sm:$0xff]
    %v568 = vld [vmem:[%s3 + $0x50] sm:$0xff]
    %v569 = vld [vmem:[%s3 + $0x58] sm:$0xff]
    %v570 = vld [vmem:[%s3 + $0x60] sm:$0xff]
    %v571 = vld [vmem:[%s3 + $0x68] sm:$0xff]
    %v572 = vld [vmem:[%s3 + $0x70] sm:$0xff]
    %v573 = vld [vmem:[%s3 + $0x78] sm:$0xff]
    %v574 = vld [vmem:[%s3 + $0x80] sm:$0xff]
    %v575 = vld [vmem:[%s3 + $0x88] sm:$0xff]
    %v576 = vld [vmem:[%s3 + $0x90] sm:$0xff]
    %v577 = vld [vmem:[%s3 + $0x98] sm:$0xff]
    %v578 = vld [vmem:[%s3 + $0xa0] sm:$0xff]
    %v579 = vld [vmem:[%s3 + $0xa8] sm:$0xff]
    %v580 = vld [vmem:[%s3 + $0xb0] sm:$0xff]
    %v581 = vld [vmem:[%s3 + $0xb8] sm:$0xff]
    %v582 = vld [vmem:[%s3 + $0xc0] sm:$0xff]
    %v583 = vmul.f32 %v333, %v533
    %v584 = vmul.f32 %v334, %v534
    %v585 = vmul.f32 %v335, %v535
    %v586 = vmul.f32 %v336, %v536
    %v587 = vmul.f32 %v337, %v537
    %v588 = vmul.f32 %v338, %v538
    %v589 = vmul.f32 %v339, %v539
    %v590 = vmul.f32 %v340, %v540
    %v591 = vmul.f32 %v341, %v541
    %v592 = vmul.f32 %v342, %v542
    %v593 = vmul.f32 %v343, %v543
    %v594 = vmul.f32 %v344, %v544
    %v595 = vmul.f32 %v345, %v545
    %v596 = vmul.f32 %v346, %v546
    %v597 = vmul.f32 %v347, %v547
    %v598 = vmul.f32 %v348, %v548
    %v599 = vmul.f32 %v349, %v549
    %v600 = vmul.f32 %v350, %v550
    %v601 = vmul.f32 %v351, %v551
    %v602 = vmul.f32 %v352, %v552
    %v603 = vmul.f32 %v353, %v553
    %v604 = vmul.f32 %v354, %v554
    %v605 = vmul.f32 %v355, %v555
    %v606 = vmul.f32 %v356, %v556
    %v607 = vmul.f32 %v357, %v557
    %v608 = vsub.f32 %v558, %v583
    %v609 = vsub.f32 %v559, %v584
    %v610 = vsub.f32 %v560, %v585
    %v611 = vsub.f32 %v561, %v586
    %v612 = vsub.f32 %v562, %v587
    %v613 = vsub.f32 %v563, %v588
    %v614 = vsub.f32 %v564, %v589
    %v615 = vsub.f32 %v565, %v590
    %v616 = vsub.f32 %v566, %v591
    %v617 = vsub.f32 %v567, %v592
    %v618 = vsub.f32 %v568, %v593
    %v619 = vsub.f32 %v569, %v594
    %v620 = vsub.f32 %v570, %v595
    %v621 = vsub.f32 %v571, %v596
    %v622 = vsub.f32 %v572, %v597
    %v623 = vsub.f32 %v573, %v598
    %v624 = vsub.f32 %v574, %v599
    %v625 = vsub.f32 %v575, %v600
    %v626 = vsub.f32 %v576, %v601
    %v627 = vsub.f32 %v577, %v602
    %v628 = vsub.f32 %v578, %v603
    %v629 = vsub.f32 %v579, %v604
    %v630 = vsub.f32 %v580, %v605
    %v631 = vsub.f32 %v581, %v606
    %v632 = vsub.f32 %v582, %v607
    %634 = vset.pattern.permute.xlu0 0
    %635 = vperm.xlu0 %634, %v533
    %v636 = vpop.permute.xlu0 %635
    %639 = vset.pattern.permute.xlu0 0
    %640 = vperm.xlu0 %639, %v534
    %v641 = vpop.permute.xlu0 %640
    %644 = vset.pattern.permute.xlu0 0
    %645 = vperm.xlu0 %644, %v535
    %v646 = vpop.permute.xlu0 %645
    %649 = vset.pattern.permute.xlu0 0
    %650 = vperm.xlu0 %649, %v536
    %v651 = vpop.permute.xlu0 %650
    %654 = vset.pattern.permute.xlu0 0
    %655 = vperm.xlu0 %654, %v537
    %v656 = vpop.permute.xlu0 %655
    %659 = vset.pattern.permute.xlu0 0
    %660 = vperm.xlu0 %659, %v538
    %v661 = vpop.permute.xlu0 %660
    %664 = vset.pattern.permute.xlu0 0
    %665 = vperm.xlu0 %664, %v539
    %v666 = vpop.permute.xlu0 %665
    %669 = vset.pattern.permute.xlu0 0
    %670 = vperm.xlu0 %669, %v540
    %v671 = vpop.permute.xlu0 %670
    %674 = vset.pattern.permute.xlu0 0
    %675 = vperm.xlu0 %674, %v541
    %v676 = vpop.permute.xlu0 %675
    %679 = vset.pattern.permute.xlu0 0
    %680 = vperm.xlu0 %679, %v542
    %v681 = vpop.permute.xlu0 %680
    %684 = vset.pattern.permute.xlu0 0
    %685 = vperm.xlu0 %684, %v543
    %v686 = vpop.permute.xlu0 %685
    %689 = vset.pattern.permute.xlu0 0
    %690 = vperm.xlu0 %689, %v544
    %v691 = vpop.permute.xlu0 %690
    %694 = vset.pattern.permute.xlu0 0
    %695 = vperm.xlu0 %694, %v545
    %v696 = vpop.permute.xlu0 %695
    %699 = vset.pattern.permute.xlu0 0
    %700 = vperm.xlu0 %699, %v546
    %v701 = vpop.permute.xlu0 %700
    %704 = vset.pattern.permute.xlu0 0
    %705 = vperm.xlu0 %704, %v547
    %v706 = vpop.permute.xlu0 %705
    %709 = vset.pattern.permute.xlu0 0
    %710 = vperm.xlu0 %709, %v548
    %v711 = vpop.permute.xlu0 %710
    %714 = vset.pattern.permute.xlu0 0
    %715 = vperm.xlu0 %714, %v549
    %v716 = vpop.permute.xlu0 %715
    %719 = vset.pattern.permute.xlu0 0
    %720 = vperm.xlu0 %719, %v550
    %v721 = vpop.permute.xlu0 %720
    %724 = vset.pattern.permute.xlu0 0
    %725 = vperm.xlu0 %724, %v551
    %v726 = vpop.permute.xlu0 %725
    %729 = vset.pattern.permute.xlu0 0
    %730 = vperm.xlu0 %729, %v552
    %v731 = vpop.permute.xlu0 %730
    %734 = vset.pattern.permute.xlu0 0
    %735 = vperm.xlu0 %734, %v553
    %v736 = vpop.permute.xlu0 %735
    %739 = vset.pattern.permute.xlu0 0
    %740 = vperm.xlu0 %739, %v554
    %v741 = vpop.permute.xlu0 %740
    %744 = vset.pattern.permute.xlu0 0
    %745 = vperm.xlu0 %744, %v555
    %v746 = vpop.permute.xlu0 %745
    %749 = vset.pattern.permute.xlu0 0
    %750 = vperm.xlu0 %749, %v556
    %v751 = vpop.permute.xlu0 %750
    %754 = vset.pattern.permute.xlu0 0
    %755 = vperm.xlu0 %754, %v557
    %v756 = vpop.permute.xlu0 %755
    %v758 = vmul.f32 %v32, %v636
    %v759 = vmul.f32 %v33, %v636
    %v760 = vmul.f32 %v34, %v641
    %v761 = vmul.f32 %v35, %v641
    %v762 = vmul.f32 %v36, %v646
    %v763 = vmul.f32 %v37, %v646
    %v764 = vmul.f32 %v38, %v651
    %v765 = vmul.f32 %v39, %v651
    %v766 = vmul.f32 %v40, %v656
    %v767 = vmul.f32 %v41, %v656
    %v768 = vmul.f32 %v42, %v661
    %v769 = vmul.f32 %v43, %v661
    %v770 = vmul.f32 %v44, %v666
    %v771 = vmul.f32 %v45, %v666
    %v772 = vmul.f32 %v46, %v671
    %v773 = vmul.f32 %v47, %v671
    %v774 = vmul.f32 %v48, %v676
    %v775 = vmul.f32 %v49, %v676
    %v776 = vmul.f32 %v50, %v681
    %v777 = vmul.f32 %v51, %v681
    %v778 = vmul.f32 %v52, %v686
    %v779 = vmul.f32 %v53, %v686
    %v780 = vmul.f32 %v54, %v691
    %v781 = vmul.f32 %v55, %v691
    %v782 = vmul.f32 %v56, %v696
    %v783 = vmul.f32 %v57, %v696
    %v784 = vmul.f32 %v58, %v701
    %v785 = vmul.f32 %v59, %v701
    %v786 = vmul.f32 %v60, %v706
    %v787 = vmul.f32 %v61, %v706
    %v788 = vmul.f32 %v62, %v711
    %v789 = vmul.f32 %v63, %v711
    %v790 = vmul.f32 %v64, %v716
    %v791 = vmul.f32 %v65, %v716
    %v792 = vmul.f32 %v66, %v721
    %v793 = vmul.f32 %v67, %v721
    %v794 = vmul.f32 %v68, %v726
    %v795 = vmul.f32 %v69, %v726
    %v796 = vmul.f32 %v70, %v731
    %v797 = vmul.f32 %v71, %v731
    %v798 = vmul.f32 %v72, %v736
    %v799 = vmul.f32 %v73, %v736
    %v800 = vmul.f32 %v74, %v741
    %v801 = vmul.f32 %v75, %v741
    %v802 = vmul.f32 %v76, %v746
    %v803 = vmul.f32 %v77, %v746
    %v804 = vmul.f32 %v78, %v751
    %v805 = vmul.f32 %v79, %v751
    %v806 = vmul.f32 %v80, %v756
    %v807 = vmul.f32 %v81, %v756
    %809 = vset.pattern.permute.xlu0 0
    %810 = vperm.xlu0 %809, %v608
    %v811 = vpop.permute.xlu0 %810
    %814 = vset.pattern.permute.xlu0 0
    %815 = vperm.xlu0 %814, %v609
    %v816 = vpop.permute.xlu0 %815
    %819 = vset.pattern.permute.xlu0 0
    %820 = vperm.xlu0 %819, %v610
    %v821 = vpop.permute.xlu0 %820
    %824 = vset.pattern.permute.xlu0 0
    %825 = vperm.xlu0 %824, %v611
    %v826 = vpop.permute.xlu0 %825
    %829 = vset.pattern.permute.xlu0 0
    %830 = vperm.xlu0 %829, %v612
    %v831 = vpop.permute.xlu0 %830
    %834 = vset.pattern.permute.xlu0 0
    %835 = vperm.xlu0 %834, %v613
    %v836 = vpop.permute.xlu0 %835
    %839 = vset.pattern.permute.xlu0 0
    %840 = vperm.xlu0 %839, %v614
    %v841 = vpop.permute.xlu0 %840
    %844 = vset.pattern.permute.xlu0 0
    %845 = vperm.xlu0 %844, %v615
    %v846 = vpop.permute.xlu0 %845
    %849 = vset.pattern.permute.xlu0 0
    %850 = vperm.xlu0 %849, %v616
    %v851 = vpop.permute.xlu0 %850
    %854 = vset.pattern.permute.xlu0 0
    %855 = vperm.xlu0 %854, %v617
    %v856 = vpop.permute.xlu0 %855
    %859 = vset.pattern.permute.xlu0 0
    %860 = vperm.xlu0 %859, %v618
    %v861 = vpop.permute.xlu0 %860
    %864 = vset.pattern.permute.xlu0 0
    %865 = vperm.xlu0 %864, %v619
    %v866 = vpop.permute.xlu0 %865
    %869 = vset.pattern.permute.xlu0 0
    %870 = vperm.xlu0 %869, %v620
    %v871 = vpop.permute.xlu0 %870
    %874 = vset.pattern.permute.xlu0 0
    %875 = vperm.xlu0 %874, %v621
    %v876 = vpop.permute.xlu0 %875
    %879 = vset.pattern.permute.xlu0 0
    %880 = vperm.xlu0 %879, %v622
    %v881 = vpop.permute.xlu0 %880
    %884 = vset.pattern.permute.xlu0 0
    %885 = vperm.xlu0 %884, %v623
    %v886 = vpop.permute.xlu0 %885
    %889 = vset.pattern.permute.xlu0 0
    %890 = vperm.xlu0 %889, %v624
    %v891 = vpop.permute.xlu0 %890
    %894 = vset.pattern.permute.xlu0 0
    %895 = vperm.xlu0 %894, %v625
    %v896 = vpop.permute.xlu0 %895
    %899 = vset.pattern.permute.xlu0 0
    %900 = vperm.xlu0 %899, %v626
    %v901 = vpop.permute.xlu0 %900
    %904 = vset.pattern.permute.xlu0 0
    %905 = vperm.xlu0 %904, %v627
    %v906 = vpop.permute.xlu0 %905
    %909 = vset.pattern.permute.xlu0 0
    %910 = vperm.xlu0 %909, %v628
    %v911 = vpop.permute.xlu0 %910
    %914 = vset.pattern.permute.xlu0 0
    %915 = vperm.xlu0 %914, %v629
    %v916 = vpop.permute.xlu0 %915
    %919 = vset.pattern.permute.xlu0 0
    %920 = vperm.xlu0 %919, %v630
    %v921 = vpop.permute.xlu0 %920
    %924 = vset.pattern.permute.xlu0 0
    %925 = vperm.xlu0 %924, %v631
    %v926 = vpop.permute.xlu0 %925
    %929 = vset.pattern.permute.xlu0 0
    %930 = vperm.xlu0 %929, %v632
    %v931 = vpop.permute.xlu0 %930
    %v933 = vadd.f32 %v758, %v811
    %v934 = vadd.f32 %v759, %v811
    %v935 = vadd.f32 %v760, %v816
    %v936 = vadd.f32 %v761, %v816
    %v937 = vadd.f32 %v762, %v821
    %v938 = vadd.f32 %v763, %v821
    %v939 = vadd.f32 %v764, %v826
    %v940 = vadd.f32 %v765, %v826
    %v941 = vadd.f32 %v766, %v831
    %v942 = vadd.f32 %v767, %v831
    %v943 = vadd.f32 %v768, %v836
    %v944 = vadd.f32 %v769, %v836
    %v945 = vadd.f32 %v770, %v841
    %v946 = vadd.f32 %v771, %v841
    %v947 = vadd.f32 %v772, %v846
    %v948 = vadd.f32 %v773, %v846
    %v949 = vadd.f32 %v774, %v851
    %v950 = vadd.f32 %v775, %v851
    %v951 = vadd.f32 %v776, %v856
    %v952 = vadd.f32 %v777, %v856
    %v953 = vadd.f32 %v778, %v861
    %v954 = vadd.f32 %v779, %v861
    %v955 = vadd.f32 %v780, %v866
    %v956 = vadd.f32 %v781, %v866
    %v957 = vadd.f32 %v782, %v871
    %v958 = vadd.f32 %v783, %v871
    %v959 = vadd.f32 %v784, %v876
    %v960 = vadd.f32 %v785, %v876
    %v961 = vadd.f32 %v786, %v881
    %v962 = vadd.f32 %v787, %v881
    %v963 = vadd.f32 %v788, %v886
    %v964 = vadd.f32 %v789, %v886
    %v965 = vadd.f32 %v790, %v891
    %v966 = vadd.f32 %v791, %v891
    %v967 = vadd.f32 %v792, %v896
    %v968 = vadd.f32 %v793, %v896
    %v969 = vadd.f32 %v794, %v901
    %v970 = vadd.f32 %v795, %v901
    %v971 = vadd.f32 %v796, %v906
    %v972 = vadd.f32 %v797, %v906
    %v973 = vadd.f32 %v798, %v911
    %v974 = vadd.f32 %v799, %v911
    %v975 = vadd.f32 %v800, %v916
    %v976 = vadd.f32 %v801, %v916
    %v977 = vadd.f32 %v802, %v921
    %v978 = vadd.f32 %v803, %v921
    %v979 = vadd.f32 %v804, %v926
    %v980 = vadd.f32 %v805, %v926
    %v981 = vadd.f32 %v806, %v931
    %v982 = vadd.f32 %v807, %v931
    %v983 = vld [vmem:[#allocation2] sm:$0xff]
    %v984 = vld [vmem:[#allocation2 + $0x8] sm:$0xff]
    %v985 = vld [vmem:[#allocation2 + $0x10] sm:$0xff]
    %v986 = vld [vmem:[#allocation2 + $0x18] sm:$0xff]
    %v987 = vld [vmem:[#allocation2 + $0x20] sm:$0xff]
    %v988 = vld [vmem:[#allocation2 + $0x28] sm:$0xff]
    %v989 = vld [vmem:[#allocation2 + $0x30] sm:$0xff]
    %v990 = vld [vmem:[#allocation2 + $0x38] sm:$0xff]
    %v991 = vld [vmem:[#allocation2 + $0x40] sm:$0xff]
    %v992 = vld [vmem:[#allocation2 + $0x48] sm:$0xff]
    %v993 = vld [vmem:[#allocation2 + $0x50] sm:$0xff]
    %v994 = vld [vmem:[#allocation2 + $0x58] sm:$0xff]
    %v995 = vld [vmem:[#allocation2 + $0x60] sm:$0xff]
    %v996 = vld [vmem:[#allocation2 + $0x68] sm:$0xff]
    %v997 = vld [vmem:[#allocation2 + $0x70] sm:$0xff]
    %v998 = vld [vmem:[#allocation2 + $0x78] sm:$0xff]
    %v999 = vld [vmem:[#allocation2 + $0x80] sm:$0xff]
    %v1000 = vld [vmem:[#allocation2 + $0x88] sm:$0xff]
    %v1001 = vld [vmem:[#allocation2 + $0x90] sm:$0xff]
    %v1002 = vld [vmem:[#allocation2 + $0x98] sm:$0xff]
    %v1003 = vld [vmem:[#allocation2 + $0xa0] sm:$0xff]
    %v1004 = vld [vmem:[#allocation2 + $0xa8] sm:$0xff]
    %v1005 = vld [vmem:[#allocation2 + $0xb0] sm:$0xff]
    %v1006 = vld [vmem:[#allocation2 + $0xb8] sm:$0xff]
    %v1007 = vld [vmem:[#allocation2 + $0xc0] sm:$0xff]
    %v1008 = vld [vmem:[#allocation2 + $0xc8] sm:$0xff]
    %v1009 = vld [vmem:[#allocation2 + $0xd0] sm:$0xff]
    %v1010 = vld [vmem:[#allocation2 + $0xd8] sm:$0xff]
    %v1011 = vld [vmem:[#allocation2 + $0xe0] sm:$0xff]
    %v1012 = vld [vmem:[#allocation2 + $0xe8] sm:$0xff]
    %v1013 = vld [vmem:[#allocation2 + $0xf0] sm:$0xff]
    %v1014 = vld [vmem:[#allocation2 + $0xf8] sm:$0xff]
    %v1015 = vld [vmem:[#allocation2 + $0x100] sm:$0xff]
    %v1016 = vld [vmem:[#allocation2 + $0x108] sm:$0xff]
    %v1017 = vld [vmem:[#allocation2 + $0x110] sm:$0xff]
    %v1018 = vld [vmem:[#allocation2 + $0x118] sm:$0xff]
    %v1019 = vld [vmem:[#allocation2 + $0x120] sm:$0xff]
    %v1020 = vld [vmem:[#allocation2 + $0x128] sm:$0xff]
    %v1021 = vld [vmem:[#allocation2 + $0x130] sm:$0xff]
    %v1022 = vld [vmem:[#allocation2 + $0x138] sm:$0xff]
    %v1023 = vld [vmem:[#allocation2 + $0x140] sm:$0xff]
    %v1024 = vld [vmem:[#allocation2 + $0x148] sm:$0xff]
    %v1025 = vld [vmem:[#allocation2 + $0x150] sm:$0xff]
    %v1026 = vld [vmem:[#allocation2 + $0x158] sm:$0xff]
    %v1027 = vld [vmem:[#allocation2 + $0x160] sm:$0xff]
    %v1028 = vld [vmem:[#allocation2 + $0x168] sm:$0xff]
    %v1029 = vld [vmem:[#allocation2 + $0x170] sm:$0xff]
    %v1030 = vld [vmem:[#allocation2 + $0x178] sm:$0xff]
    %v1031 = vld [vmem:[#allocation2 + $0x180] sm:$0xff]
    %v1032 = vld [vmem:[#allocation2 + $0x188] sm:$0xff]
    %v1033 = vadd.f32 %v933, %v983
    %v1034 = vadd.f32 %v934, %v984
    %v1035 = vadd.f32 %v935, %v985
    %v1036 = vadd.f32 %v936, %v986
    %v1037 = vadd.f32 %v937, %v987
    %v1038 = vadd.f32 %v938, %v988
    %v1039 = vadd.f32 %v939, %v989
    %v1040 = vadd.f32 %v940, %v990
    %v1041 = vadd.f32 %v941, %v991
    %v1042 = vadd.f32 %v942, %v992
    %v1043 = vadd.f32 %v943, %v993
    %v1044 = vadd.f32 %v944, %v994
    %v1045 = vadd.f32 %v945, %v995
    %v1046 = vadd.f32 %v946, %v996
    %v1047 = vadd.f32 %v947, %v997
    %v1048 = vadd.f32 %v948, %v998
    %v1049 = vadd.f32 %v949, %v999
    %v1050 = vadd.f32 %v950, %v1000
    %v1051 = vadd.f32 %v951, %v1001
    %v1052 = vadd.f32 %v952, %v1002
    %v1053 = vadd.f32 %v953, %v1003
    %v1054 = vadd.f32 %v954, %v1004
    %v1055 = vadd.f32 %v955, %v1005
    %v1056 = vadd.f32 %v956, %v1006
    %v1057 = vadd.f32 %v957, %v1007
    %v1058 = vadd.f32 %v958, %v1008
    %v1059 = vadd.f32 %v959, %v1009
    %v1060 = vadd.f32 %v960, %v1010
    %v1061 = vadd.f32 %v961, %v1011
    %v1062 = vadd.f32 %v962, %v1012
    %v1063 = vadd.f32 %v963, %v1013
    %v1064 = vadd.f32 %v964, %v1014
    %v1065 = vadd.f32 %v965, %v1015
    %v1066 = vadd.f32 %v966, %v1016
    %v1067 = vadd.f32 %v967, %v1017
    %v1068 = vadd.f32 %v968, %v1018
    %v1069 = vadd.f32 %v969, %v1019
    %v1070 = vadd.f32 %v970, %v1020
    %v1071 = vadd.f32 %v971, %v1021
    %v1072 = vadd.f32 %v972, %v1022
    %v1073 = vadd.f32 %v973, %v1023
    %v1074 = vadd.f32 %v974, %v1024
    %v1075 = vadd.f32 %v975, %v1025
    %v1076 = vadd.f32 %v976, %v1026
    %v1077 = vadd.f32 %v977, %v1027
    %v1078 = vadd.f32 %v978, %v1028
    %v1079 = vadd.f32 %v979, %v1029
    %v1080 = vadd.f32 %v980, %v1030
    %v1081 = vadd.f32 %v981, %v1031
    %v1082 = vadd.f32 %v982, %v1032
    %1083 = vst [vmem:[#allocation5] sm:$0xff] %v1033
    %1084 = vst.msk [vmem:[#allocation5 + $0x8] sm:$0xff] %vm82, %v1034
    %1085 = vst [vmem:[#allocation5 + $0x10] sm:$0xff] %v1035
    %1086 = vst.msk [vmem:[#allocation5 + $0x18] sm:$0xff] %vm82, %v1036
    %1087 = vst [vmem:[#allocation5 + $0x20] sm:$0xff] %v1037
    %1088 = vst.msk [vmem:[#allocation5 + $0x28] sm:$0xff] %vm82, %v1038
    %1089 = vst [vmem:[#allocation5 + $0x30] sm:$0xff] %v1039
    %1090 = vst.msk [vmem:[#allocation5 + $0x38] sm:$0xff] %vm82, %v1040
    %1091 = vst [vmem:[#allocation5 + $0x40] sm:$0xff] %v1041
    %1092 = vst.msk [vmem:[#allocation5 + $0x48] sm:$0xff] %vm82, %v1042
    %1093 = vst [vmem:[#allocation5 + $0x50] sm:$0xff] %v1043
    %1094 = vst.msk [vmem:[#allocation5 + $0x58] sm:$0xff] %vm82, %v1044
    %1095 = vst [vmem:[#allocation5 + $0x60] sm:$0xff] %v1045
    %1096 = vst.msk [vmem:[#allocation5 + $0x68] sm:$0xff] %vm82, %v1046
    %1097 = vst [vmem:[#allocation5 + $0x70] sm:$0xff] %v1047
    %1098 = vst.msk [vmem:[#allocation5 + $0x78] sm:$0xff] %vm82, %v1048
    %1099 = vst [vmem:[#allocation5 + $0x80] sm:$0xff] %v1049
    %1100 = vst.msk [vmem:[#allocation5 + $0x88] sm:$0xff] %vm82, %v1050
    %1101 = vst [vmem:[#allocation5 + $0x90] sm:$0xff] %v1051
    %1102 = vst.msk [vmem:[#allocation5 + $0x98] sm:$0xff] %vm82, %v1052
    %1103 = vst [vmem:[#allocation5 + $0xa0] sm:$0xff] %v1053
    %1104 = vst.msk [vmem:[#allocation5 + $0xa8] sm:$0xff] %vm82, %v1054
    %1105 = vst [vmem:[#allocation5 + $0xb0] sm:$0xff] %v1055
    %1106 = vst.msk [vmem:[#allocation5 + $0xb8] sm:$0xff] %vm82, %v1056
    %1107 = vst [vmem:[#allocation5 + $0xc0] sm:$0xff] %v1057
    %1108 = vst.msk [vmem:[#allocation5 + $0xc8] sm:$0xff] %vm82, %v1058
    %1109 = vst [vmem:[#allocation5 + $0xd0] sm:$0xff] %v1059
    %1110 = vst.msk [vmem:[#allocation5 + $0xd8] sm:$0xff] %vm82, %v1060
    %1111 = vst [vmem:[#allocation5 + $0xe0] sm:$0xff] %v1061
    %1112 = vst.msk [vmem:[#allocation5 + $0xe8] sm:$0xff] %vm82, %v1062
    %1113 = vst [vmem:[#allocation5 + $0xf0] sm:$0xff] %v1063
    %1114 = vst.msk [vmem:[#allocation5 + $0xf8] sm:$0xff] %vm82, %v1064
    %1115 = vst [vmem:[#allocation5 + $0x100] sm:$0xff] %v1065
    %1116 = vst.msk [vmem:[#allocation5 + $0x108] sm:$0xff] %vm82, %v1066
    %1117 = vst [vmem:[#allocation5 + $0x110] sm:$0xff] %v1067
    %1118 = vst.msk [vmem:[#allocation5 + $0x118] sm:$0xff] %vm82, %v1068
    %1119 = vst [vmem:[#allocation5 + $0x120] sm:$0xff] %v1069
    %1120 = vst.msk [vmem:[#allocation5 + $0x128] sm:$0xff] %vm82, %v1070
    %1121 = vst [vmem:[#allocation5 + $0x130] sm:$0xff] %v1071
    %1122 = vst.msk [vmem:[#allocation5 + $0x138] sm:$0xff] %vm82, %v1072
    %1123 = vst [vmem:[#allocation5 + $0x140] sm:$0xff] %v1073
    %1124 = vst.msk [vmem:[#allocation5 + $0x148] sm:$0xff] %vm82, %v1074
    %1125 = vst [vmem:[#allocation5 + $0x150] sm:$0xff] %v1075
    %1126 = vst.msk [vmem:[#allocation5 + $0x158] sm:$0xff] %vm82, %v1076
    %1127 = vst [vmem:[#allocation5 + $0x160] sm:$0xff] %v1077
    %1128 = vst.msk [vmem:[#allocation5 + $0x168] sm:$0xff] %vm82, %v1078
    %1129 = vst [vmem:[#allocation5 + $0x170] sm:$0xff] %v1079
    %1130 = vst.msk [vmem:[#allocation5 + $0x178] sm:$0xff] %vm82, %v1080
    %1131 = vst [vmem:[#allocation5 + $0x180] sm:$0xff] %v1081
    %1132 = vst.msk [vmem:[#allocation5 + $0x188] sm:$0xff] %vm82, %v1082
    // Predicated region
    $region22: #{tpu_custom_call.1} parent=1 // pred_check
      _
    $region23: #{tpu_custom_call.1} parent=1 // pred_check_branch
      %1134 = sbr.rel (0) target = $region25
    $region24: #{tpu_custom_call.1} parent=1 // pred_region
      %s1136 = ssub.s32 6400, 6400
      %1137 = vsyncadd [#allocation4], %s1136
      %s1138 = sshll.u32 [#allocation5], 4
      %s1139 = int_to_ptr.vmem [resolvable:$true] %s1138
      %1144 = dma.vmem_to_hbm [thread:$0]  %s1139, 6400, %s4, [#allocation4], 256, 256, 16
    $region25: #{tpu_custom_call.1} parent=1 // pred_fallthru
      _
    // Predicated region
    $region26: #{tpu_custom_call.1} parent=1 // pred_check
      _
    $region27: #{tpu_custom_call.1} parent=1 // pred_check_branch
      %1146 = sbr.rel (0) target = $region29
    $region28: #{tpu_custom_call.1} parent=1 // pred_region
      %1147 = dma.done [#allocation4], 6400
    $region29: #{tpu_custom_call.1} parent=1 // pred_fallthru
      _
    %1148 = vsyncpa [#allocation3], 1
    %1149 = vsyncpa [#allocation4], 1

</llo_original>
